<compile_context>
chip_gen: v7x
topology: tpu7x:2x2x1
jax: 0.10.0
libtpu: 0.0.40
codegen_flags: <defaults>
</compile_context>

<pallas_src>
import functools

import jax
import jax.numpy as jnp
from jax.experimental import pallas as pl
from jax.experimental.pallas import tpu as pltpu

CLIPRANGE = 5.0
LN_EPS = 1e-5


def _cdiv(a, b):
    return -(-a // b)


@functools.lru_cache(maxsize=None)
def _vmem_budget_bytes():
    """Per-generation scoped-VMEM budget: half of physical, capped at 64 MiB.

    v5e/v6e (128 MiB physical) -> 64 MiB; v7x (64 MiB per TC) -> 32 MiB.
    """
    phys = 64 * 1024 * 1024  # conservative fallback (v7x per-TC VMEM)
    try:
        info = pltpu.get_tpu_info()
        phys = int(getattr(info, "vmem_capacity_bytes", phys))
    except Exception:
        pass
    return int(min(phys // 2, 64 * 1024 * 1024))


def _choose_tiling(B, d_in, d_model, w_bytes, out_bytes, budget):
    """Pick (block_rows, block_k) so pipeline buffers + temporaries fit budget."""
    # --- K (d_in) tiling: only when the double-buffered weight would eat more
    # than ~1/4 of the budget and d_in is big enough to split.
    block_k = d_in
    if 2 * d_in * d_model * w_bytes > budget // 4 and d_in >= 512:
        limit = (budget // 4) // max(2 * d_model * w_bytes, 1)
        bk = (min(limit, d_in) // 128) * 128
        # Largest 128-multiple that divides d_in: padded K elements would feed
        # garbage into the accumulator, so the K tile must divide exactly.
        while bk >= 128 and d_in % bk != 0:
            bk -= 128
        if bk >= 128:
            block_k = bk
    # TODO(synk): if d_in has no 128-multiple divisor, W stays un-tiled and can
    # still overrun the budget for extreme d_in*d_model; mask the K tail then.

    # --- Fixed VMEM (double-buffered by the default pipeline).
    fixed = (2 * block_k * d_model * w_bytes     # weight tile
             + 2 * 2 * block_k * 4               # (2, block_k) mean / inv_std
             + 2 * 3 * d_model * 4)              # (3, d_model) b / gamma / beta

    # --- Per-row VMEM: pipeline buffers + accumulator + in-kernel temporaries.
    per_row = (2 * block_k * 4                   # x tile (double-buffered f32)
               + 2 * d_model * out_bytes         # out tile (double-buffered)
               + 4 * d_model                     # f32 accumulator scratch
               + 2 * block_k                     # bf16 xn temporary
               + 3 * 4 * d_model)                # f32 h / centered / y temps
    cap = max(budget - fixed, 0) // per_row

    if B < 256 or cap < 256:
        # Small batch (or VMEM-starved): one resident block if it fits,
        # otherwise the largest 8-aligned row tile that does.
        rows = min(B, max(int(cap), 8))
        if rows < B:
            rows = max((rows // 8) * 8, 8)
        return rows, block_k

    # Mid/large batch: keep >= 2 grid steps so the pipeline overlaps DMA with
    # compute and both v7x TensorCores get work; 512-row tiles already sit at
    # ~85% of the HBM roofline, so bigger buys nothing.
    rows = min(int(cap), 512, _cdiv(B, 2))
    align = 256 if rows >= 256 else 128          # 256-aligned M for v6e/v7x MXU
    rows = max((rows // align) * align, 128)
    return min(rows, B), block_k


def _input_embedding_kernel(x_ref, innorm_ref, w_ref, outp_ref, o_ref,
                            acc_ref):
    k = pl.program_id(1)

    @pl.when(k == 0)
    def _():
        acc_ref[...] = jnp.zeros_like(acc_ref)

    # --- InputNorm (eval path): (x - mean) * inv_std, clamp to +/-cliprange.
    stats = innorm_ref[...]                       # (2, bk) f32: mean, inv_std
    xn = (x_ref[...] - stats[0:1, :]) * stats[1:2, :]
    xn = jnp.clip(xn, -CLIPRANGE, CLIPRANGE)

    # --- Linear partial product on the MXU (bf16 operands, f32 accumulate).
    acc_ref[...] += jnp.dot(xn.astype(w_ref.dtype), w_ref[...],
                            preferred_element_type=jnp.float32)

    # --- Epilogue on the last K step: bias + ReLU + LayerNorm (+affine).
    @pl.when(k == pl.num_programs(1) - 1)
    def _():
        p = outp_ref[...]                         # (3, d_model): b, gamma, beta
        h = jnp.maximum(acc_ref[...] + p[0:1, :], 0.0)
        mu = jnp.mean(h, axis=-1, keepdims=True)  # row reductions -> XLU
        c = h - mu
        var = jnp.mean(c * c, axis=-1, keepdims=True)
        y = c * jax.lax.rsqrt(var + LN_EPS)       # rsqrt -> EUP
        o_ref[...] = (y * p[1:2, :] + p[2:3, :]).astype(o_ref.dtype)


@functools.partial(
    jax.jit,
    static_argnames=("block_rows", "block_k", "matmul_in_bf16", "out_dtype",
                     "vmem_budget_bytes"))
def input_embedding(x, count, mean, squares_sum, w, b, gamma, beta,
                    block_rows=None, block_k=None, matmul_in_bf16=True,
                    out_dtype=jnp.float32, vmem_budget_bytes=None):
    """x: (B, d_in) f32 -> (B, d_model).  w is (d_in, d_model) == W_torch.T."""
    B, d_in = x.shape
    d_model = w.shape[1]

    # Running-stat glue (matches InputNorm.stddev()):
    #   sd = sqrt(squares_sum / (count - 1)); sd[sd == 0] = 1
    # applied only when count > 1 (otherwise identity).
    sd = jnp.sqrt(squares_sum / jnp.maximum(count - 1.0, 1.0))
    sd = jnp.where(sd == 0.0, 1.0, sd)
    apply_norm = count > 1.0
    eff_mean = jnp.where(apply_norm, mean, jnp.zeros_like(mean))
    eff_inv_std = jnp.where(apply_norm, 1.0 / sd, jnp.ones_like(sd))

    # Pack the broadcast vectors: 2 DMA'd operands instead of 5.
    innorm = jnp.stack([eff_mean, eff_inv_std]).astype(jnp.float32)   # (2, d_in)
    outparams = jnp.stack([b, gamma, beta]).astype(jnp.float32)       # (3, d_model)

    # Cast the weight once (MXU is bf16-native on v5e/v6e/v7x; halves its HBM
    # traffic and VMEM footprint).  Accumulation stays f32.
    w_mm = w.astype(jnp.bfloat16) if matmul_in_bf16 else w
    w_bytes = 2 if matmul_in_bf16 else 4
    out_bytes = jnp.dtype(out_dtype).itemsize

    budget = (int(vmem_budget_bytes) if vmem_budget_bytes is not None
              else _vmem_budget_bytes())
    auto_rows, auto_k = _choose_tiling(B, d_in, d_model, w_bytes, out_bytes,
                                       budget)
    block_rows = min(auto_rows if block_rows is None else block_rows, B)
    block_k = min(auto_k if block_k is None else block_k, d_in)

    grid = (_cdiv(B, block_rows), _cdiv(d_in, block_k))

    cost = pl.CostEstimate(
        flops=2 * B * d_in * d_model + 10 * B * d_model + 4 * B * d_in,
        transcendentals=B,
        bytes_accessed=(B * d_in * 4 + d_in * d_model * w_bytes
                        + B * d_model * out_bytes
                        + (2 * d_in + 3 * d_model) * 4),
    )

    return pl.pallas_call(
        _input_embedding_kernel,
        out_shape=jax.ShapeDtypeStruct((B, d_model), out_dtype),
        grid_spec=pltpu.PrefetchScalarGridSpec(
            num_scalar_prefetch=0,
            grid=grid,
            in_specs=[
                pl.BlockSpec((block_rows, block_k), lambda i, k: (i, k)),
                pl.BlockSpec((2, block_k), lambda i, k: (0, k)),
                pl.BlockSpec((block_k, d_model), lambda i, k: (k, 0)),
                pl.BlockSpec((3, d_model), lambda i, k: (0, 0)),
            ],
            out_specs=pl.BlockSpec((block_rows, d_model), lambda i, k: (i, 0)),
            scratch_shapes=[pltpu.VMEM((block_rows, d_model), jnp.float32)],
        ),
        compiler_params=pltpu.CompilerParams(
            dimension_semantics=("parallel", "arbitrary"),
            vmem_limit_bytes=int(budget)),
        cost_estimate=cost,
    )(x, innorm, w_mm, outparams)


def _reference(x, count, mean, squares_sum, w, b, gamma, beta,
               matmul_in_bf16=True):
    sd = jnp.sqrt(squares_sum / jnp.maximum(count - 1.0, 1.0))
    sd = jnp.where(sd == 0.0, 1.0, sd)
    mu0 = jnp.where(count > 1.0, mean, jnp.zeros_like(mean))
    inv = jnp.where(count > 1.0, 1.0 / sd, jnp.ones_like(sd))
    xn = jnp.clip((x - mu0) * inv, -CLIPRANGE, CLIPRANGE)
    if matmul_in_bf16:
        h = jnp.dot(xn.astype(jnp.bfloat16), w.astype(jnp.bfloat16),
                    preferred_element_type=jnp.float32)
    else:
        h = jnp.dot(xn, w, preferred_element_type=jnp.float32)
    h = jnp.maximum(h + b, 0.0)
    mu = h.mean(-1, keepdims=True)
    var = ((h - mu) ** 2).mean(-1, keepdims=True)
    return (h - mu) / jnp.sqrt(var + LN_EPS) * gamma + beta


if __name__ == "__main__":
    B, d_in, d_model = 16, 32, 64

    key = jax.random.PRNGKey(0)
    kx, km, ks, kw, kb, kg, kbeta = jax.random.split(key, 7)

    x = jax.random.normal(kx, (B, d_in), dtype=jnp.float32)

    # InputNorm buffers: simulate a populated running estimate (count > 1).
    count = jnp.float32(100.0)
    mean = 0.1 * jax.random.normal(km, (d_in,), dtype=jnp.float32)
    squares_sum = (count - 1.0) * (
        0.5 + jax.random.uniform(ks, (d_in,), dtype=jnp.float32))

    # Linear(d_in, d_model): weight stored as (d_in, d_model) = W_torch.T
    w = (jax.random.normal(kw, (d_in, d_model), dtype=jnp.float32)
         / jnp.sqrt(d_in))
    b = 0.01 * jax.random.normal(kb, (d_model,), dtype=jnp.float32)

    # norm_fn(d_model) == nn.LayerNorm(d_model): elementwise affine params.
    gamma = 1.0 + 0.05 * jax.random.normal(kg, (d_model,), dtype=jnp.float32)
    beta = 0.05 * jax.random.normal(kbeta, (d_model,), dtype=jnp.float32)

    # Reference uses the same bf16 matmul operand precision so the comparison
    # is exact modulo accumulation order.
    ref = _reference(x, count, mean, squares_sum, w, b, gamma, beta,
                     matmul_in_bf16=True)

    # 1) Auto-tiled path (single resident block for this small batch).
    out = input_embedding(x, count, mean, squares_sum, w, b, gamma, beta)
    out = jax.block_until_ready(out)
    assert out.shape == (B, d_model)
    assert jnp.allclose(out, ref, atol=1e-4, rtol=1e-4), (
        float(jnp.max(jnp.abs(out - ref))))

    # 2) Forced multi-step grid to exercise the pipelined / accumulator path.
    out2 = input_embedding(x, count, mean, squares_sum, w, b, gamma, beta,
                           block_rows=8)
    out2 = jax.block_until_ready(out2)
    assert jnp.allclose(out2, ref, atol=1e-4, rtol=1e-4), (
        float(jnp.max(jnp.abs(out2 - ref))))

    print("KERNEL_OK")
</pallas_src>

<mosaic_0001>
module attributes {stable_mosaic.version = 11 : i64} {
  func.func @_input_embedding_kernel(%arg0: i32, %arg1: i32, %arg2: memref<16x32xf32, #tpu.memory_space<vmem>>, %arg3: memref<2x32xf32, #tpu.memory_space<vmem>>, %arg4: memref<32x64xbf16, #tpu.memory_space<vmem>>, %arg5: memref<3x64xf32, #tpu.memory_space<vmem>>, %arg6: memref<16x64xf32, #tpu.memory_space<vmem>>, %arg7: memref<16x64xf32, #tpu.memory_space<vmem>>) attributes {dimension_semantics = [#tpu.dimension_semantics<parallel>, #tpu.dimension_semantics<arbitrary>], iteration_bounds = array<i64: 1, 1>, scalar_prefetch = 0 : i64, scratch_operands = 1 : i64, tpu.core_type = #tpu.core_type<tc>, window_params = [{transform_indices = @transform_0, window_bounds = array<i64: 16, 32>}, {transform_indices = @transform_1, window_bounds = array<i64: 2, 32>}, {transform_indices = @transform_2, window_bounds = array<i64: 32, 64>}, {pipeline_mode = #tpu.pipeline_mode<synchronous>, transform_indices = @transform_3, window_bounds = array<i64: 3, 64>}, {transform_indices = @transform_4, window_bounds = array<i64: 16, 64>}]} {
    %c0_i32 = arith.constant 0 : i32
    %0 = arith.cmpi eq, %arg1, %c0_i32 : i32
    %1 = arith.extui %0 : i1 to i32
    %c0_i32_0 = arith.constant 0 : i32
    %2 = arith.cmpi ne, %1, %c0_i32_0 : i32
    scf.if %2 {
      %cst_14 = arith.constant 0.000000e+00 : f32
      %24 = vector.broadcast %cst_14 : f32 to vector<16x64xf32>
      %c0_15 = arith.constant 0 : index
      %c0_16 = arith.constant 0 : index
      %25 = vector.load %arg7[%c0_15, %c0_16] : memref<16x64xf32, #tpu.memory_space<vmem>>, vector<16x64xf32>
      tpu.vector_store %arg7[%c0_15, %c0_16], %24 {strides = array<i32>} : memref<16x64xf32, #tpu.memory_space<vmem>>, vector<16x64xf32>,
    } else {
    }
    %c0 = arith.constant 0 : index
    %c0_1 = arith.constant 0 : index
    %3 = vector.load %arg3[%c0, %c0_1] : memref<2x32xf32, #tpu.memory_space<vmem>>, vector<2x32xf32>
    %c0_2 = arith.constant 0 : index
    %c0_3 = arith.constant 0 : index
    %4 = vector.load %arg2[%c0_2, %c0_3] : memref<16x32xf32, #tpu.memory_space<vmem>>, vector<16x32xf32>
    %5 = vector.extract_strided_slice %3 {offsets = [0, 0], sizes = [1, 32], strides = [1, 1]} : vector<2x32xf32> to vector<1x32xf32>
    %6 = vector.broadcast %5 : vector<1x32xf32> to vector<16x32xf32>
    %7 = arith.subf %4, %6 : vector<16x32xf32>
    %8 = vector.extract_strided_slice %3 {offsets = [1, 0], sizes = [1, 32], strides = [1, 1]} : vector<2x32xf32> to vector<1x32xf32>
    %9 = vector.broadcast %8 : vector<1x32xf32> to vector<16x32xf32>
    %10 = arith.mulf %7, %9 : vector<16x32xf32>
    %cst = arith.constant -5.000000e+00 : f32
    %cst_4 = arith.constant 5.000000e+00 : f32
    %11 = vector.broadcast %cst : f32 to vector<16x32xf32>
    %12 = arith.maximumf %11, %10 : vector<16x32xf32>
    %13 = vector.broadcast %cst_4 : f32 to vector<16x32xf32>
    %14 = arith.minimumf %13, %12 : vector<16x32xf32>
    %c0_5 = arith.constant 0 : index
    %c0_6 = arith.constant 0 : index
    %15 = vector.load %arg7[%c0_5, %c0_6] : memref<16x64xf32, #tpu.memory_space<vmem>>, vector<16x64xf32>
    %16 = arith.truncf %14 : vector<16x32xf32> to vector<16x32xbf16>
    %c0_7 = arith.constant 0 : index
    %c0_8 = arith.constant 0 : index
    %17 = vector.load %arg4[%c0_7, %c0_8] : memref<32x64xbf16, #tpu.memory_space<vmem>>, vector<32x64xbf16>
    %cst_9 = arith.constant dense<0.000000e+00> : vector<16x64xf32>
    %18 = tpu.matmul %16, %17, %cst_9 {dimension_numbers = #tpu.dot_dimension_numbers<[1], [0], [0], [1], [0, 0, 1, 1], [], []>} : vector<16x32xbf16>, vector<32x64xbf16>, vector<16x64xf32> -> vector<16x64xf32>
    %19 = arith.addf %15, %18 : vector<16x64xf32>
    %c0_10 = arith.constant 0 : index
    %c0_11 = arith.constant 0 : index
    %20 = vector.load %arg7[%c0_10, %c0_11] : memref<16x64xf32, #tpu.memory_space<vmem>>, vector<16x64xf32>
    tpu.vector_store %arg7[%c0_10, %c0_11], %19 {strides = array<i32>} : memref<16x64xf32, #tpu.memory_space<vmem>>, vector<16x64xf32>,
    %c0_i32_12 = arith.constant 0 : i32
    %21 = arith.cmpi eq, %arg1, %c0_i32_12 : i32
    %22 = arith.extui %21 : i1 to i32
    %c0_i32_13 = arith.constant 0 : i32
    %23 = arith.cmpi ne, %22, %c0_i32_13 : i32
    scf.if %23 {
      %c0_14 = arith.constant 0 : index
      %c0_15 = arith.constant 0 : index
      %24 = vector.load %arg5[%c0_14, %c0_15] : memref<3x64xf32, #tpu.memory_space<vmem>>, vector<3x64xf32>
      %c0_16 = arith.constant 0 : index
      %c0_17 = arith.constant 0 : index
      %25 = vector.load %arg7[%c0_16, %c0_17] : memref<16x64xf32, #tpu.memory_space<vmem>>, vector<16x64xf32>
      %26 = vector.extract_strided_slice %24 {offsets = [0, 0], sizes = [1, 64], strides = [1, 1]} : vector<3x64xf32> to vector<1x64xf32>
      %27 = vector.broadcast %26 : vector<1x64xf32> to vector<16x64xf32>
      %28 = arith.addf %25, %27 : vector<16x64xf32>
      %cst_18 = arith.constant 0.000000e+00 : f32
      %29 = vector.broadcast %cst_18 : f32 to vector<16x64xf32>
      %30 = arith.maximumf %28, %29 : vector<16x64xf32>
      %cst_19 = arith.constant dense<0.000000e+00> : vector<16xf32>
      %31 = vector.multi_reduction <add>, %30, %cst_19 [1] : vector<16x64xf32> to vector<16xf32>
      %32 = vector.shape_cast %31 : vector<16xf32> to vector<16x1xf32>
      %cst_20 = arith.constant 6.400000e+01 : f32
      %33 = vector.broadcast %cst_20 : f32 to vector<16x1xf32>
      %34 = arith.divf %32, %33 : vector<16x1xf32>
      %35 = vector.broadcast %34 : vector<16x1xf32> to vector<16x64xf32>
      %36 = arith.subf %30, %35 : vector<16x64xf32>
      %37 = arith.mulf %36, %36 : vector<16x64xf32>
      %cst_21 = arith.constant dense<0.000000e+00> : vector<16xf32>
      %38 = vector.multi_reduction <add>, %37, %cst_21 [1] : vector<16x64xf32> to vector<16xf32>
      %39 = vector.shape_cast %38 : vector<16xf32> to vector<16x1xf32>
      %cst_22 = arith.constant 6.400000e+01 : f32
      %40 = vector.broadcast %cst_22 : f32 to vector<16x1xf32>
      %41 = arith.divf %39, %40 : vector<16x1xf32>
      %cst_23 = arith.constant 9.99999974E-6 : f32
      %42 = vector.broadcast %cst_23 : f32 to vector<16x1xf32>
      %43 = arith.addf %41, %42 : vector<16x1xf32>
      %44 = math.rsqrt %43 : vector<16x1xf32>
      %45 = vector.broadcast %44 : vector<16x1xf32> to vector<16x64xf32>
      %46 = arith.mulf %36, %45 : vector<16x64xf32>
      %47 = vector.extract_strided_slice %24 {offsets = [1, 0], sizes = [1, 64], strides = [1, 1]} : vector<3x64xf32> to vector<1x64xf32>
      %48 = vector.broadcast %47 : vector<1x64xf32> to vector<16x64xf32>
      %49 = arith.mulf %46, %48 : vector<16x64xf32>
      %50 = vector.extract_strided_slice %24 {offsets = [2, 0], sizes = [1, 64], strides = [1, 1]} : vector<3x64xf32> to vector<1x64xf32>
      %51 = vector.broadcast %50 : vector<1x64xf32> to vector<16x64xf32>
      %52 = arith.addf %49, %51 : vector<16x64xf32>
      %c0_24 = arith.constant 0 : index
      %c0_25 = arith.constant 0 : index
      %53 = vector.load %arg6[%c0_24, %c0_25] : memref<16x64xf32, #tpu.memory_space<vmem>>, vector<16x64xf32>
      tpu.vector_store %arg6[%c0_24, %c0_25], %52 {strides = array<i32>} : memref<16x64xf32, #tpu.memory_space<vmem>>, vector<16x64xf32>,
    } else {
    }
    return
  }
  func.func @transform_0(%arg0: i32, %arg1: i32) -> (i32, i32) {
    %c0_i32 = arith.constant 0 : i32
    return %arg0, %arg1 : i32, i32
  }
  func.func @transform_1(%arg0: i32, %arg1: i32) -> (i32, i32) {
    %c0_i32 = arith.constant 0 : i32
    %c0_i32_0 = arith.constant 0 : i32
    return %c0_i32, %arg1 : i32, i32
  }
  func.func @transform_2(%arg0: i32, %arg1: i32) -> (i32, i32) {
    %c0_i32 = arith.constant 0 : i32
    %c0_i32_0 = arith.constant 0 : i32
    return %arg1, %c0_i32 : i32, i32
  }
  func.func @transform_3(%arg0: i32, %arg1: i32) -> (i32, i32) {
    %c0_i32 = arith.constant 0 : i32
    %c0_i32_0 = arith.constant 0 : i32
    %c0_i32_1 = arith.constant 0 : i32
    return %c0_i32, %c0_i32_0 : i32, i32
  }
  func.func @transform_4(%arg0: i32, %arg1: i32) -> (i32, i32) {
    %c0_i32 = arith.constant 0 : i32
    %c0_i32_0 = arith.constant 0 : i32
    return %arg0, %c0_i32 : i32, i32
  }
}

</mosaic_0001>

<llo_original>
// kernel: input_embedding.1
$region0: #{input_embedding.1}
  #allocation0 [shape = 'u32[]', space=smem, size = 0x4, offset = 0x4, fixed_abs, tag = 'smem constant byte address 0x4 - core index']
  #allocation1 [shape = 'u32[144,128]{1,0:T(1,128)}', space=vmem, size = 0x12000, scoped, tag = 'internal scratch']
  #allocation2 [shape = 'f32[16,64]{1,0:T(8,128)}', space=vmem, size = 0x2000, scoped, tag = 'scratch operand']
  %s0 = inlined_call_operand.vmem [shape: f32[16,32], index: 0, kind: input, shape index: {}]
  %s1 = inlined_call_operand.vmem [shape: f32[2,32], index: 1, kind: input, shape index: {}]
  %s2 = inlined_call_operand.vmem [shape: bf16[32,64], index: 2, kind: input, shape index: {}]
  %s3 = inlined_call_operand.vmem [shape: f32[3,64], index: 3, kind: input, shape index: {}]
  %s4 = inlined_call_operand.hbm [shape: f32[16,64], index: 4, kind: output, shape index: {}]
  %s5 = sld [smem:[#allocation0]]
  $region34: #{input_embedding.1} parent=0
    _
  %s7 = ssub.s32 1, %s5
  %s8 = scalar_select 0, %s7, %s5
  $region1: #{input_embedding.1} parent=0
    #allocation3 [shape = 'u8[8192]{0}', space=vmem, size = 0x2000, scoped, tag = 'output window, operand 0, single buffered']
    #allocation4 [shape = 's32[1]{0}', space=sflag, size = 0x4, scoped, tag = 'scoped memory for input_embedding.1']
    %9 = vsyncpa [#allocation4], 0
    // Predicated region
    $region2: #{input_embedding.1} parent=1 // pred_check
      _
    $region3: #{input_embedding.1} parent=1 // pred_check_branch
      %11 = sbr.rel (0) target = $region5
    $region4: #{input_embedding.1} parent=1 // pred_region
      _
    $region5: #{input_embedding.1} parent=1 // pred_fallthru
      _
    // Predicated region
    $region6: #{input_embedding.1} parent=1 // pred_check
      _
    $region7: #{input_embedding.1} parent=1 // pred_check_branch
      %13 = sbr.rel (0) target = $region9
    $region8: #{input_embedding.1} parent=1 // pred_region
      _
    $region9: #{input_embedding.1} parent=1 // pred_fallthru
      _
    // Predicated region
    $region10: #{input_embedding.1} parent=1 // pred_check
      _
    $region11: #{input_embedding.1} parent=1 // pred_check_branch
      %15 = sbr.rel (0) target = $region13
    $region12: #{input_embedding.1} parent=1 // pred_region
      _
    $region13: #{input_embedding.1} parent=1 // pred_fallthru
      _
    // Predicated region
    $region14: #{input_embedding.1} parent=1 // pred_check
      _
    $region15: #{input_embedding.1} parent=1 // pred_check_branch
      %17 = sbr.rel (0) target = $region17
    $region16: #{input_embedding.1} parent=1 // pred_region
      _
    $region17: #{input_embedding.1} parent=1 // pred_fallthru
      _
    %p19 = scmp.eq.s32.totalorder 0, 0
    // Predicated region
    $region18: #{input_embedding.1} parent=1 // pred_check
      %p20 = pneg %p19
    $region19: #{input_embedding.1} parent=1 // pred_check_branch
      %22 = sbr.rel (%p20) target = $region21
    $region20: #{input_embedding.1} parent=1 // pred_region
      %vm23 = vcmask 523264
      %24 = vst.msk [vmem:[#allocation2] sm:$0xff] %vm23, 0.0
      %25 = vst.msk [vmem:[#allocation2 + $0x8] sm:$0xff] %vm23, 0.0
    $region21: #{input_embedding.1} parent=1 // pred_fallthru
      _
    %v26 = vld [vmem:[%s1] sm:$0x3]
    %v27 = vld [vmem:[%s0] sm:$0xff]
    %v28 = vld [vmem:[%s0 + $0x8] sm:$0xff]
    %v29 = vlaneseq
    %v30 = vshrl.u32 %v29, 7
    %v31 = vsub.s32 0, %v30
    %v32 = vrot.slane %v26, %v31
    %v33 = vsub.f32 %v27, %v32
    %v34 = vsub.f32 %v28, %v32
    %v35 = vlaneseq
    %v36 = vshrl.u32 %v35, 7
    %v37 = vsub.s32 1, %v36
    %v38 = vrot.slane %v26, %v37
    %v39 = vmul.f32 %v33, %v38
    %v40 = vmul.f32 %v34, %v38
    %v41 = vmax.f32 %v39, -5.0
    %v42 = vmax.f32 %v40, -5.0
    %v43 = vmin.f32 %v41, 5.0
    %v44 = vmin.f32 %v42, 5.0
    %v45 = vld [vmem:[#allocation2] sm:$0xff]
    %v46 = vld [vmem:[#allocation2 + $0x8] sm:$0xff]
    %v47 = vpack.c.bf16 %v44, %v43
    %v48 = vld [vmem:[%s2] sm:$0xf]
    %v49 = vld [vmem:[%s2 + $0x4] sm:$0xf]
    %v50 = vld [vmem:[%s2 + $0x8] sm:$0xf]
    %v51 = vld [vmem:[%s2 + $0xc] sm:$0xf]
    %v56 = vunpack.c.l.b16 %v48
    %v57 = vunpack.c.l.b16 %v49
    %v58 = vunpack.c.l.b16 %v50
    %v59 = vunpack.c.l.b16 %v51
    %v60 = vpack.c.b16 %v57, %v56
    %v61 = vpack.c.b16 %v59, %v58
    %vm64 = vcmask 261120
    %v66 = vsel %vm64, %v47, 0
    %68 = vmatprep.subr.bf16.mxu0 0
    %69 = vmatpush1.bf16.msra.mxu0 %v60
    %70 = vmatprep.subr.bf16.mxu0 0
    %71 = vmatpush1.bf16.msra.mxu0 %v61
    %72 = vmatprep.subr.bf16.mxu0 0
    %73 = vmatpush1.bf16.msra.mxu0 0
    %74 = vmatprep.subr.bf16.mxu0 0
    %75 = vmatpush1.bf16.msra.mxu0 0
    %76 = vmatprep.subr.bf16.mxu0 0
    %77 = vmatpush1.bf16.msra.mxu0 0
    %78 = vmatprep.subr.bf16.mxu0 0
    %79 = vmatpush1.bf16.msra.mxu0 0
    %80 = vmatprep.subr.bf16.mxu0 0
    %81 = vmatpush1.bf16.msra.mxu0 0
    %82 = vmatprep.subr.bf16.mxu0 0
    %83 = vmatpush1.bf16.msra.mxu0 0
    %84 = vmatprep.subr.bf16.mxu0 0
    %85 = vmatpush1.bf16.msra.mxu0 0
    %86 = vmatprep.subr.bf16.mxu0 0
    %87 = vmatpush1.bf16.msra.mxu0 0
    %88 = vmatprep.subr.bf16.mxu0 0
    %89 = vmatpush1.bf16.msra.mxu0 0
    %90 = vmatprep.subr.bf16.mxu0 0
    %91 = vmatpush1.bf16.msra.mxu0 0
    %92 = vmatprep.subr.bf16.mxu0 0
    %93 = vmatpush1.bf16.msra.mxu0 0
    %94 = vmatprep.subr.bf16.mxu0 0
    %95 = vmatpush1.bf16.msra.mxu0 0
    %96 = vmatprep.subr.bf16.mxu0 0
    %97 = vmatpush1.bf16.msra.mxu0 0
    %98 = vmatprep.subr.bf16.mxu0 0
    %99 = vmatpush1.bf16.msra.mxu0 0
    %100 = vmatprep.mubr.bf16.mxu0 0
    %101 = vmatmul.mubr.bf16.gmra.mrb[0].mxu0 %v66
    %v102 = vpop.f32.mrb[0].mxu0
    %v103 = vadd.f32 0.0, %v102
    %v104 = vpop.f32.mrb[0].mxu0
    %v105 = vpop.f32.mrb[0].mxu0
    %v106 = vadd.f32 0.0, %v105
    %v107 = vpop.f32.mrb[0].mxu0
    %108 = vdwg.mxu0
    %v109 = vadd.f32 %v45, %v103
    %v110 = vadd.f32 %v46, %v106
    %vm111 = vcmask 523264
    %112 = vst.msk [vmem:[#allocation2] sm:$0xff] %vm111, %v109
    %113 = vst.msk [vmem:[#allocation2 + $0x8] sm:$0xff] %vm111, %v110
    // Predicated region
    $region22: #{input_embedding.1} parent=1 // pred_check
      %p114 = pneg %p19
    $region23: #{input_embedding.1} parent=1 // pred_check_branch
      %116 = sbr.rel (%p114) target = $region25
    $region24: #{input_embedding.1} parent=1 // pred_region
      %v117 = vld [vmem:[%s3] sm:$0x7]
      %v118 = vld [vmem:[#allocation2] sm:$0xff]
      %v119 = vld [vmem:[#allocation2 + $0x8] sm:$0xff]
      %v120 = vlaneseq
      %v121 = vshrl.u32 %v120, 7
      %v122 = vsub.s32 0, %v121
      %v123 = vrot.slane %v117, %v122
      %v124 = vadd.f32 %v118, %v123
      %v125 = vadd.f32 %v119, %v123
      %v126 = vmax.f32 %v124, 0.0
      %v127 = vmax.f32 %v125, 0.0
      %v128 = vsel %vm111, %v126, 0.0
      %129 = vadd.xlane.f32.xlu0 %v128
      %v130 = vpop.xlane.xlu0 %129
      %v131 = vsel %vm111, %v127, 0.0
      %132 = vadd.xlane.f32.xlu0 %v131
      %v133 = vpop.xlane.xlu0 %132
      %v134 = vrcp.pop 64.0
      %v135 = vmul.f32 %v130, %v134
      %v136 = vmul.f32 %v133, %v134
      %v137 = vsub.f32 %v126, %v135
      %v138 = vsub.f32 %v127, %v136
      %v139 = vmul.f32 %v137, %v137
      %v140 = vmul.f32 %v138, %v138
      %v141 = vsel %vm111, %v139, 0.0
      %142 = vadd.xlane.f32.xlu0 %v141
      %v143 = vpop.xlane.xlu0 %142
      %v144 = vsel %vm111, %v140, 0.0
      %145 = vadd.xlane.f32.xlu0 %v144
      %v146 = vpop.xlane.xlu0 %145
      %v147 = vmul.f32 %v143, %v134
      %v148 = vmul.f32 %v146, %v134
      %v149 = vadd.f32 %v147, 1e-05
      %v150 = vadd.f32 %v148, 1e-05
      %v151 = vrsqrt.pop %v149
      %v152 = vrsqrt.pop %v150
      %v153 = vmul.f32 %v137, %v151
      %v154 = vmul.f32 %v138, %v152
      %v155 = vlaneseq
      %v156 = vshrl.u32 %v155, 7
      %v157 = vsub.s32 1, %v156
      %v158 = vrot.slane %v117, %v157
      %v159 = vmul.f32 %v153, %v158
      %v160 = vmul.f32 %v154, %v158
      %v161 = vlaneseq
      %v162 = vshrl.u32 %v161, 7
      %v163 = vsub.s32 2, %v162
      %v164 = vrot.slane %v117, %v163
      %v165 = vadd.f32 %v159, %v164
      %v166 = vadd.f32 %v160, %v164
      %167 = vst.msk [vmem:[#allocation3] sm:$0xff] %vm111, %v165
      %168 = vst.msk [vmem:[#allocation3 + $0x8] sm:$0xff] %vm111, %v166
    $region25: #{input_embedding.1} parent=1 // pred_fallthru
      _
    // Predicated region
    $region26: #{input_embedding.1} parent=1 // pred_check
      _
    $region27: #{input_embedding.1} parent=1 // pred_check_branch
      %170 = sbr.rel (0) target = $region29
    $region28: #{input_embedding.1} parent=1 // pred_region
      %s172 = ssub.s32 256, 256
      %173 = vsyncadd [#allocation4], %s172
      %s174 = sshll.u32 [#allocation3], 4
      %s175 = int_to_ptr.vmem [resolvable:$true] %s174
      %180 = dma.vmem_to_hbm [thread:$0]  %s175, 256, %s4, [#allocation4], 128, 128, 8
    $region29: #{input_embedding.1} parent=1 // pred_fallthru
      _
    // Predicated region
    $region30: #{input_embedding.1} parent=1 // pred_check
      _
    $region31: #{input_embedding.1} parent=1 // pred_check_branch
      %182 = sbr.rel (0) target = $region33
    $region32: #{input_embedding.1} parent=1 // pred_region
      %183 = dma.done [#allocation4], 256
    $region33: #{input_embedding.1} parent=1 // pred_fallthru
      _
    %184 = vsyncpa [#allocation4], 1

</llo_original>
